<compile_context>
chip_gen: v5e
topology: v5e:2x2
jax: 0.10.0
libtpu: 0.0.40
codegen_flags: <defaults>
</compile_context>

<pallas_src>
import math

import jax
import jax.numpy as jnp
from jax.experimental import pallas as pl
from jax.experimental.pallas import tpu as pltpu


# ------------------------------ configuration -------------------------------

_FUSE_MAX_NODES = 256           # whole-network single-kernel path below this
_P_RESIDENT_BYTES = 8 * 2 ** 20  # keep P (=XW) fully VMEM-resident below this
_NEG_PAD_BIAS = -1e30            # bias on padded class cols (masks log_softmax)


def _round_up(n, m):
    return ((n + m - 1) // m) * m


def _vmem_limit_bytes():
    """Per-generation scoped-VMEM budget (v5e/v6e: 128 MiB phys, v7x: 64 MiB)."""
    try:
        phys = int(pltpu.get_tpu_info().vmem_capacity_bytes)
    except Exception:
        phys = 64 * 2 ** 20        # conservative default: v7x physical size
    return max(min(phys * 3 // 4, 100 * 2 ** 20), 32 * 2 ** 20)


def _row_tile(n_pad):
    """Row tile; keep >= 2 row tiles so the parallel axis can use both v7x TCs."""
    if n_pad >= 1024 and n_pad % 256 == 0:
        return 256
    if n_pad >= 256:
        return 128
    return n_pad


def _k_tile(n_pad, adj_itemsize, max_tk=None):
    """Largest 128-multiple divisor of n_pad up to 2048 (bf16) / 1024 (f32)."""
    cap = 2048 if adj_itemsize <= 2 else 1024
    if max_tk is not None:
        cap = min(cap, max_tk)
    cap = max(cap, 128)
    m = n_pad // 128
    q = min(m, cap // 128)
    while m % q:
        q -= 1
    return 128 * q


# ----------------- block-sparse adjacency tile schedule ---------------------

def _tile_schedule(adj_pad, tm, tk):
    """Per row-tile list of NONZERO adjacency k-tiles.

    kmap[i, s] = k-tile visited at reduction step s of row tile i.  Steps past
    kcnt[i] repeat the last useful tile, so the pipelined DMA sees an unchanged
    block index (no re-copy) while the kernel skips the matmul.
    """
    n_pad = adj_pad.shape[0]
    n_r, n_k = n_pad // tm, n_pad // tk
    nz = jnp.any((adj_pad != 0).reshape(n_r, tm, n_k, tk), axis=(1, 3))
    cnt = jnp.sum(nz, axis=1).astype(jnp.int32)
    order = jnp.argsort(jnp.logical_not(nz).astype(jnp.int32), axis=1)
    pos = jnp.minimum(jnp.arange(n_k, dtype=jnp.int32)[None, :],
                      jnp.maximum(cnt - 1, 0)[:, None])
    kmap = jnp.take_along_axis(order.astype(jnp.int32), pos, axis=1)
    return kmap.astype(jnp.int32), cnt


# ----------------------- stage 1: P = concat_feats @ W ----------------------

def _make_xw_kernel(nblocks):
    """o = sum_j x_j @ w_j (== concat(x_0..x_{nb-1}) @ W), f32 accumulation."""
    def kernel(*refs):
        xs = refs[:nblocks]
        ws = refs[nblocks:2 * nblocks]
        o_ref = refs[2 * nblocks]
        acc = jnp.dot(xs[0][...], ws[0][...], preferred_element_type=jnp.float32)
        for j in range(1, nblocks):
            acc = acc + jnp.dot(xs[j][...], ws[j][...],
                                preferred_element_type=jnp.float32)
        o_ref[...] = acc.astype(o_ref.dtype)
    return kernel


def _xw(feature_blocks, weight_slices, tm, out_dtype, vmem_limit):
    nb = len(feature_blocks)
    n_pad = feature_blocks[0].shape[0]
    out_pad = weight_slices[0].shape[1]
    in_specs = (
        [pl.BlockSpec((tm, fb.shape[1]), lambda i: (i, 0)) for fb in feature_blocks]
        + [pl.BlockSpec((ws.shape[0], out_pad), lambda i: (0, 0)) for ws in weight_slices]
    )
    return pl.pallas_call(
        _make_xw_kernel(nb),
        out_shape=jax.ShapeDtypeStruct((n_pad, out_pad), out_dtype),
        grid_spec=pltpu.PrefetchScalarGridSpec(
            num_scalar_prefetch=0,
            grid=(n_pad // tm,),
            in_specs=in_specs,
            out_specs=pl.BlockSpec((tm, out_pad), lambda i: (i, 0)),
        ),
        compiler_params=pltpu.CompilerParams(
            dimension_semantics=("parallel",),
            vmem_limit_bytes=vmem_limit,
        ),
    )(*feature_blocks, *weight_slices)


# ------------------ stage 2: out = act( adj @ P + bias ) --------------------

def _make_agg_kernel(mode, tk, p_resident):
    """Block-sparse tiled reduction with f32 accumulator and epilogue act."""
    def kernel(kmap_ref, cnt_ref, adj_ref, p_ref, b_ref, o_ref, acc_ref):
        i = pl.program_id(0)
        s = pl.program_id(1)

        @pl.when(s == 0)
        def _():
            acc_ref[...] = jnp.zeros_like(acc_ref)

        @pl.when(s < cnt_ref[i])                 # skip padded (all-zero) tiles
        def _():
            if p_resident:
                start = pl.multiple_of(kmap_ref[i, s] * tk, 128)
                p_tile = p_ref[pl.ds(start, tk), :]
            else:
                p_tile = p_ref[...]
            acc_ref[...] += jnp.dot(adj_ref[...], p_tile,
                                    preferred_element_type=jnp.float32)

        @pl.when(s == pl.num_programs(1) - 1)
        def _():
            z = acc_ref[...] + b_ref[...]        # bias only in the epilogue
            if mode == "tanh":
                o_ref[...] = jnp.tanh(z).astype(o_ref.dtype)
            else:  # stable log_softmax; padded class cols carry -1e30 bias
                m = jnp.max(z, axis=-1, keepdims=True)
                sz = z - m
                lse = jnp.log(jnp.sum(jnp.exp(sz), axis=-1, keepdims=True))
                o_ref[...] = (sz - lse).astype(o_ref.dtype)
    return kernel


def _aggregate(adj_pad, p, bias, kmap, kcnt, tm, tk, mode, out_dtype, vmem_limit):
    n_pad = adj_pad.shape[0]
    out_pad = p.shape[1]
    n_r, n_k = n_pad // tm, n_pad // tk
    p_resident = int(p.size) * p.dtype.itemsize <= _P_RESIDENT_BYTES
    if p_resident:   # P DMA'd once per call, sliced per k-tile inside the kernel
        p_spec = pl.BlockSpec((n_pad, out_pad), lambda i, s, km, kc: (0, 0))
    else:            # huge graphs: data-dependent P tile
        p_spec = pl.BlockSpec((tk, out_pad), lambda i, s, km, kc: (km[i, s], 0))
    return pl.pallas_call(
        _make_agg_kernel(mode, tk, p_resident),
        out_shape=jax.ShapeDtypeStruct((n_pad, out_pad), out_dtype),
        grid_spec=pltpu.PrefetchScalarGridSpec(
            num_scalar_prefetch=2,
            grid=(n_r, n_k),
            in_specs=[
                pl.BlockSpec((tm, tk), lambda i, s, km, kc: (i, km[i, s])),  # adj
                p_spec,                                                       # P
                pl.BlockSpec((1, out_pad), lambda i, s, km, kc: (0, 0)),      # bias
            ],
            out_specs=pl.BlockSpec((tm, out_pad), lambda i, s, km, kc: (i, 0)),
            scratch_shapes=[pltpu.VMEM((tm, out_pad), jnp.float32)],
        ),
        compiler_params=pltpu.CompilerParams(
            dimension_semantics=("parallel", "arbitrary"),
            vmem_limit_bytes=vmem_limit,
        ),
    )(kmap, kcnt, adj_pad, p, bias)


# -------------- fused whole-network kernel for tiny graphs ------------------

def _make_fused_kernel(nlayers):
    """All layers in one kernel; everything (incl. adj) resident in VMEM."""
    def kernel(*refs):
        adj_ref, x_ref = refs[0], refs[1]
        out_ref = refs[-1]
        adj = adj_ref[...]
        blocks = [x_ref[...]]
        pos = 2
        for k in range(nlayers + 1):
            nb = len(blocks)
            w_refs = refs[pos:pos + nb]
            b_ref = refs[pos + nb]
            pos += nb + 1
            p = jnp.dot(blocks[0], w_refs[0][...],
                        preferred_element_type=jnp.float32)
            for j in range(1, nb):
                p += jnp.dot(blocks[j], w_refs[j][...],
                             preferred_element_type=jnp.float32)
            z = jnp.dot(adj, p.astype(adj.dtype),
                        preferred_element_type=jnp.float32) + b_ref[...]
            if k < nlayers:
                blocks.append(jnp.tanh(z).astype(blocks[0].dtype))
            else:
                m = jnp.max(z, axis=-1, keepdims=True)
                sz = z - m
                lse = jnp.log(jnp.sum(jnp.exp(sz), axis=-1, keepdims=True))
                out_ref[...] = (sz - lse).astype(out_ref.dtype)
    return kernel


# ------------------------------ param helpers --------------------------------

def init_snowball_params(key, nfeat, nlayers, nhid, nclass):
    """Matches snowball_layer.reset_parameters(): U(-1/sqrt(out), 1/sqrt(out))."""
    params = {"hidden": []}
    for k in range(nlayers):
        in_dim = k * nhid + nfeat
        key, kw, kb = jax.random.split(key, 3)
        stdv = 1.0 / math.sqrt(nhid)
        w = jax.random.uniform(kw, (in_dim, nhid), jnp.float32, -stdv, stdv)
        b = jax.random.uniform(kb, (1, nhid), jnp.float32, -stdv, stdv)
        params["hidden"].append((w, b))
    in_dim = nlayers * nhid + nfeat
    key, kw, kb = jax.random.split(key, 3)
    stdv = 1.0 / math.sqrt(nclass)
    w_out = jax.random.uniform(kw, (in_dim, nclass), jnp.float32, -stdv, stdv)
    b_out = jax.random.uniform(kb, (1, nclass), jnp.float32, -stdv, stdv)
    params["out"] = (w_out, b_out)
    return params


def _weight_row_slices(w, nfeat, nhid, nhid_pad, nblocks, out_pad, dtype):
    """Row-split W to match [x, h_0, ...]; zero-pad hidden rows to nhid_pad and
    all columns to out_pad (lane-dense 128-wide outputs)."""
    out_dim = w.shape[1]
    wc = w.astype(dtype)

    def pad(a, rows):
        if rows == a.shape[0] and out_pad == out_dim:
            return a
        return jnp.zeros((rows, out_pad), dtype).at[:a.shape[0], :out_dim].set(a)

    slices = [pad(wc[:nfeat], nfeat)]
    for j in range(nblocks - 1):
        slices.append(pad(wc[nfeat + j * nhid: nfeat + (j + 1) * nhid], nhid_pad))
    return slices


def _pad_bias(b, out_pad, fill):
    bb = jnp.asarray(b, jnp.float32).reshape(1, -1)
    out_dim = bb.shape[1]
    if out_pad == out_dim:
        return bb
    return jnp.full((1, out_pad), fill, jnp.float32).at[:, :out_dim].set(bb)


# ------------------------------ model forward --------------------------------

def snowball_forward(params, x, adj, *, compute_dtype=jnp.float32,
                     adj_dtype=jnp.bfloat16, max_tk=None):
    """Eval-mode snowball forward (dropout: training=False -> identity).

    adj_dtype controls the MXU operands of the memory-bound A@P stage (bf16 by
    default; pass jnp.float32 for bit-accurate results); compute_dtype controls
    the feature/weight path of the XW stage. Accumulation, bias and activations
    are always f32.
    """
    n, nfeat = x.shape
    nlayers = len(params["hidden"])
    nhid = params["hidden"][0][0].shape[1] if nlayers else 0
    nclass = params["out"][0].shape[1]
    nhid_pad = _round_up(nhid, 128) if nlayers else 0
    nclass_pad = _round_up(nclass, 128)
    vmem_limit = _vmem_limit_bytes()

    # 128-aligned node padding; skip the pad copy entirely when not needed.
    n_pad = max(128, _round_up(n, 128))
    adj_c = adj.astype(adj_dtype)
    x_c = x.astype(compute_dtype)
    if n_pad != n:
        adj_pad = jnp.zeros((n_pad, n_pad), adj_dtype).at[:n, :n].set(adj_c)
        x_pad = jnp.zeros((n_pad, nfeat), compute_dtype).at[:n, :].set(x_c)
    else:
        adj_pad, x_pad = adj_c, x_c

    # Pre-pad weights / biases once per forward (padded class cols get -1e30
    # bias so the log_softmax reduction ignores them).
    layer_specs = []
    nblocks = 1
    for (w, b) in params["hidden"]:
        layer_specs.append((
            _weight_row_slices(w, nfeat, nhid, nhid_pad, nblocks, nhid_pad,
                               compute_dtype),
            _pad_bias(b, nhid_pad, 0.0)))
        nblocks += 1
    w_out, b_out = params["out"]
    layer_specs.append((
        _weight_row_slices(w_out, nfeat, nhid, nhid_pad, nblocks, nclass_pad,
                           compute_dtype),
        _pad_bias(b_out, nclass_pad, _NEG_PAD_BIAS)))

    # ---- tiny-graph path: the whole network in one fused pallas_call -------
    flat = []
    for ws, bp in layer_specs:
        flat.extend(ws)
        flat.append(bp)
    est = (int(adj_pad.size) * adj_pad.dtype.itemsize
           + int(x_pad.size) * x_pad.dtype.itemsize
           + sum(int(a.size) * a.dtype.itemsize for a in flat)
           + (nlayers + 3) * n_pad * max(nhid_pad, nclass_pad) * 4)
    if n_pad <= _FUSE_MAX_NODES and est * 2 <= vmem_limit:
        out = pl.pallas_call(
            _make_fused_kernel(nlayers),
            out_shape=jax.ShapeDtypeStruct((n_pad, nclass_pad), jnp.float32),
            compiler_params=pltpu.CompilerParams(vmem_limit_bytes=vmem_limit),
        )(adj_pad, x_pad, *flat)
        return out[:n, :nclass]

    # ---- tiled block-sparse path --------------------------------------------
    tm = _row_tile(n_pad)
    tk = _k_tile(n_pad, jnp.dtype(adj_dtype).itemsize, max_tk)
    kmap, kcnt = _tile_schedule(adj_pad, tm, tk)     # one adj pass, reused/layer
    mxu_dtype = adj_dtype                            # both A@P operands

    blocks = [x_pad]
    out = None
    for li, (ws, bp) in enumerate(layer_specs):
        is_out = li == len(layer_specs) - 1
        p = _xw(blocks, ws, tm, mxu_dtype, vmem_limit)
        h = _aggregate(adj_pad, p, bp, kmap, kcnt, tm, tk,
                       "log_softmax" if is_out else "tanh",
                       jnp.float32 if is_out else compute_dtype,
                       vmem_limit)
        if is_out:
            out = h
        else:
            blocks.append(h)   # padded rows hold tanh(bias); never read beyond :n
    return out[:n, :nclass]


# ------------------------------ pure-JAX reference ---------------------------

def _reference_forward(params, x, adj):
    blocks = []
    for (w, b) in params["hidden"]:
        inp = jnp.concatenate([x] + blocks, axis=1) if blocks else x
        blocks.append(jnp.tanh(adj @ (inp @ w) + b))
    w_out, b_out = params["out"]
    inp = jnp.concatenate([x] + blocks, axis=1)
    z = adj @ (inp @ w_out) + b_out
    return jax.nn.log_softmax(z, axis=1)


# ---------------------------------- main -------------------------------------

if __name__ == "__main__":
    key = jax.random.PRNGKey(0)

    def make_inputs(k, n, nfeat, band=None):
        kx, ka = jax.random.split(k)
        xv = jax.random.normal(kx, (n, nfeat), jnp.float32)
        a = (jax.random.uniform(ka, (n, n)) > 0.9).astype(jnp.float32)
        if band is not None:   # banded -> genuinely block-sparse adjacency
            ii = jnp.arange(n)
            a = a * (jnp.abs(ii[:, None] - ii[None, :]) < band).astype(jnp.float32)
        a = jnp.maximum(a, a.T) + jnp.eye(n, dtype=jnp.float32)
        return xv, a / jnp.sum(a, axis=1, keepdims=True)  # row-norm + self loops

    def run(params, xv, adjv, **kw):
        return jax.block_until_ready(snowball_forward(params, xv, adjv, **kw))

    # Case 1: tiny graph -> fully fused single-kernel path.
    n1, nfeat1, nlayers1, nhid1, nclass1 = 8, 16, 2, 32, 8
    key, k_in, k_p = jax.random.split(key, 3)
    x1, adj1 = make_inputs(k_in, n1, nfeat1)
    params1 = init_snowball_params(k_p, nfeat1, nlayers1, nhid1, nclass1)
    ref1 = _reference_forward(params1, x1, adj1)
    out1 = run(params1, x1, adj1, adj_dtype=jnp.float32)   # strict f32 check
    assert out1.shape == (n1, nclass1)
    assert jnp.allclose(out1, ref1, atol=1e-4, rtol=1e-4)
    out1b = run(params1, x1, adj1)                         # default: bf16 adj
    assert jnp.allclose(out1b, ref1, atol=0.3, rtol=0.3)

    # Case 2: larger graph -> tiled, pipelined, block-sparse-scheduled path.
    n2, nfeat2, nlayers2, nhid2, nclass2 = 512, 64, 2, 32, 8
    key, k_in, k_p = jax.random.split(key, 3)
    x2, adj2 = make_inputs(k_in, n2, nfeat2)
    params2 = init_snowball_params(k_p, nfeat2, nlayers2, nhid2, nclass2)
    ref2 = _reference_forward(params2, x2, adj2)
    out2 = run(params2, x2, adj2, adj_dtype=jnp.float32)   # strict, 1 k-tile
    assert out2.shape == (n2, nclass2)
    assert jnp.allclose(out2, ref2, atol=5e-4, rtol=5e-4)
    out2b = run(params2, x2, adj2, adj_dtype=jnp.float32, max_tk=128)  # 4 k-tiles
    assert jnp.allclose(out2b, ref2, atol=5e-4, rtol=5e-4)
    out2c = run(params2, x2, adj2)                         # default bf16 adj / P
    assert bool(jnp.all(jnp.isfinite(out2c)))
    assert jnp.allclose(out2c, ref2, atol=0.3, rtol=0.3)
    out2d = run(params2, x2, adj2, compute_dtype=jnp.bfloat16)  # fully bf16 MXU
    assert bool(jnp.all(jnp.isfinite(out2d)))
    assert jnp.allclose(out2d, ref2, atol=0.3, rtol=0.3)

    # Case 3: banded adjacency -> many all-zero adj tiles actually skipped.
    n3, nfeat3, nlayers3, nhid3, nclass3 = 768, 32, 2, 32, 8
    key, k_in, k_p = jax.random.split(key, 3)
    x3, adj3 = make_inputs(k_in, n3, nfeat3, band=96)
    params3 = init_snowball_params(k_p, nfeat3, nlayers3, nhid3, nclass3)
    ref3 = _reference_forward(params3, x3, adj3)
    out3 = run(params3, x3, adj3, adj_dtype=jnp.float32, max_tk=128)
    assert out3.shape == (n3, nclass3)
    assert jnp.allclose(out3, ref3, atol=5e-4, rtol=5e-4)

    print("KERNEL_OK")
</pallas_src>

<mosaic_0001>
module attributes {stable_mosaic.version = 11 : i64} {
  func.func @kernel(%arg0: memref<128x128xf32, #tpu.memory_space<vmem>>, %arg1: memref<128x16xf32, #tpu.memory_space<vmem>>, %arg2: memref<16x128xf32, #tpu.memory_space<vmem>>, %arg3: memref<1x128xf32, #tpu.memory_space<vmem>>, %arg4: memref<16x128xf32, #tpu.memory_space<vmem>>, %arg5: memref<128x128xf32, #tpu.memory_space<vmem>>, %arg6: memref<1x128xf32, #tpu.memory_space<vmem>>, %arg7: memref<16x128xf32, #tpu.memory_space<vmem>>, %arg8: memref<128x128xf32, #tpu.memory_space<vmem>>, %arg9: memref<128x128xf32, #tpu.memory_space<vmem>>, %arg10: memref<1x128xf32, #tpu.memory_space<vmem>>, %arg11: memref<128x128xf32, #tpu.memory_space<vmem>>) attributes {dimension_semantics = [], scalar_prefetch = 0 : i64, scratch_operands = 0 : i64, tpu.core_type = #tpu.core_type<tc>} {
    %c0 = arith.constant 0 : index
    %c0_0 = arith.constant 0 : index
    %0 = vector.load %arg0[%c0, %c0_0] : memref<128x128xf32, #tpu.memory_space<vmem>>, vector<128x128xf32>
    %c0_1 = arith.constant 0 : index
    %c0_2 = arith.constant 0 : index
    %1 = vector.load %arg1[%c0_1, %c0_2] : memref<128x16xf32, #tpu.memory_space<vmem>>, vector<128x16xf32>
    %c0_3 = arith.constant 0 : index
    %c0_4 = arith.constant 0 : index
    %2 = vector.load %arg2[%c0_3, %c0_4] : memref<16x128xf32, #tpu.memory_space<vmem>>, vector<16x128xf32>
    %cst = arith.constant dense<0.000000e+00> : vector<128x128xf32>
    %3 = tpu.matmul %1, %2, %cst {dimension_numbers = #tpu.dot_dimension_numbers<[1], [0], [0], [1], [0, 0, 1, 1], [], []>} : vector<128x16xf32>, vector<16x128xf32>, vector<128x128xf32> -> vector<128x128xf32>
    %cst_5 = arith.constant dense<0.000000e+00> : vector<128x128xf32>
    %4 = tpu.matmul %0, %3, %cst_5 {dimension_numbers = #tpu.dot_dimension_numbers<[1], [0], [0], [1], [0, 0, 1, 1], [], []>} : vector<128x128xf32>, vector<128x128xf32>, vector<128x128xf32> -> vector<128x128xf32>
    %c0_6 = arith.constant 0 : index
    %c0_7 = arith.constant 0 : index
    %5 = vector.load %arg3[%c0_6, %c0_7] : memref<1x128xf32, #tpu.memory_space<vmem>>, vector<1x128xf32>
    %6 = vector.broadcast %5 : vector<1x128xf32> to vector<128x128xf32>
    %7 = arith.addf %4, %6 : vector<128x128xf32>
    %8 = math.tanh %7 : vector<128x128xf32>
    %c0_8 = arith.constant 0 : index
    %c0_9 = arith.constant 0 : index
    %9 = vector.load %arg4[%c0_8, %c0_9] : memref<16x128xf32, #tpu.memory_space<vmem>>, vector<16x128xf32>
    %cst_10 = arith.constant dense<0.000000e+00> : vector<128x128xf32>
    %10 = tpu.matmul %1, %9, %cst_10 {dimension_numbers = #tpu.dot_dimension_numbers<[1], [0], [0], [1], [0, 0, 1, 1], [], []>} : vector<128x16xf32>, vector<16x128xf32>, vector<128x128xf32> -> vector<128x128xf32>
    %c0_11 = arith.constant 0 : index
    %c0_12 = arith.constant 0 : index
    %11 = vector.load %arg5[%c0_11, %c0_12] : memref<128x128xf32, #tpu.memory_space<vmem>>, vector<128x128xf32>
    %cst_13 = arith.constant dense<0.000000e+00> : vector<128x128xf32>
    %12 = tpu.matmul %8, %11, %cst_13 {dimension_numbers = #tpu.dot_dimension_numbers<[1], [0], [0], [1], [0, 0, 1, 1], [], []>} : vector<128x128xf32>, vector<128x128xf32>, vector<128x128xf32> -> vector<128x128xf32>
    %13 = arith.addf %10, %12 : vector<128x128xf32>
    %cst_14 = arith.constant dense<0.000000e+00> : vector<128x128xf32>
    %14 = tpu.matmul %0, %13, %cst_14 {dimension_numbers = #tpu.dot_dimension_numbers<[1], [0], [0], [1], [0, 0, 1, 1], [], []>} : vector<128x128xf32>, vector<128x128xf32>, vector<128x128xf32> -> vector<128x128xf32>
    %c0_15 = arith.constant 0 : index
    %c0_16 = arith.constant 0 : index
    %15 = vector.load %arg6[%c0_15, %c0_16] : memref<1x128xf32, #tpu.memory_space<vmem>>, vector<1x128xf32>
    %16 = vector.broadcast %15 : vector<1x128xf32> to vector<128x128xf32>
    %17 = arith.addf %14, %16 : vector<128x128xf32>
    %18 = math.tanh %17 : vector<128x128xf32>
    %c0_17 = arith.constant 0 : index
    %c0_18 = arith.constant 0 : index
    %19 = vector.load %arg7[%c0_17, %c0_18] : memref<16x128xf32, #tpu.memory_space<vmem>>, vector<16x128xf32>
    %cst_19 = arith.constant dense<0.000000e+00> : vector<128x128xf32>
    %20 = tpu.matmul %1, %19, %cst_19 {dimension_numbers = #tpu.dot_dimension_numbers<[1], [0], [0], [1], [0, 0, 1, 1], [], []>} : vector<128x16xf32>, vector<16x128xf32>, vector<128x128xf32> -> vector<128x128xf32>
    %c0_20 = arith.constant 0 : index
    %c0_21 = arith.constant 0 : index
    %21 = vector.load %arg8[%c0_20, %c0_21] : memref<128x128xf32, #tpu.memory_space<vmem>>, vector<128x128xf32>
    %cst_22 = arith.constant dense<0.000000e+00> : vector<128x128xf32>
    %22 = tpu.matmul %8, %21, %cst_22 {dimension_numbers = #tpu.dot_dimension_numbers<[1], [0], [0], [1], [0, 0, 1, 1], [], []>} : vector<128x128xf32>, vector<128x128xf32>, vector<128x128xf32> -> vector<128x128xf32>
    %23 = arith.addf %20, %22 : vector<128x128xf32>
    %c0_23 = arith.constant 0 : index
    %c0_24 = arith.constant 0 : index
    %24 = vector.load %arg9[%c0_23, %c0_24] : memref<128x128xf32, #tpu.memory_space<vmem>>, vector<128x128xf32>
    %cst_25 = arith.constant dense<0.000000e+00> : vector<128x128xf32>
    %25 = tpu.matmul %18, %24, %cst_25 {dimension_numbers = #tpu.dot_dimension_numbers<[1], [0], [0], [1], [0, 0, 1, 1], [], []>} : vector<128x128xf32>, vector<128x128xf32>, vector<128x128xf32> -> vector<128x128xf32>
    %26 = arith.addf %23, %25 : vector<128x128xf32>
    %cst_26 = arith.constant dense<0.000000e+00> : vector<128x128xf32>
    %27 = tpu.matmul %0, %26, %cst_26 {dimension_numbers = #tpu.dot_dimension_numbers<[1], [0], [0], [1], [0, 0, 1, 1], [], []>} : vector<128x128xf32>, vector<128x128xf32>, vector<128x128xf32> -> vector<128x128xf32>
    %c0_27 = arith.constant 0 : index
    %c0_28 = arith.constant 0 : index
    %28 = vector.load %arg10[%c0_27, %c0_28] : memref<1x128xf32, #tpu.memory_space<vmem>>, vector<1x128xf32>
    %29 = vector.broadcast %28 : vector<1x128xf32> to vector<128x128xf32>
    %30 = arith.addf %27, %29 : vector<128x128xf32>
    %cst_29 = arith.constant dense<0xFF800000> : vector<128xf32>
    %31 = vector.multi_reduction <maximumf>, %30, %cst_29 [1] : vector<128x128xf32> to vector<128xf32>
    %32 = vector.shape_cast %31 : vector<128xf32> to vector<128x1xf32>
    %33 = vector.broadcast %32 : vector<128x1xf32> to vector<128x128xf32>
    %34 = arith.subf %30, %33 : vector<128x128xf32>
    %35 = math.exp %34 : vector<128x128xf32>
    %cst_30 = arith.constant dense<0.000000e+00> : vector<128xf32>
    %36 = vector.multi_reduction <add>, %35, %cst_30 [1] : vector<128x128xf32> to vector<128xf32>
    %37 = vector.shape_cast %36 : vector<128xf32> to vector<128x1xf32>
    %38 = math.log %37 : vector<128x1xf32>
    %39 = vector.broadcast %38 : vector<128x1xf32> to vector<128x128xf32>
    %40 = arith.subf %34, %39 : vector<128x128xf32>
    %c0_31 = arith.constant 0 : index
    %c0_32 = arith.constant 0 : index
    %41 = vector.load %arg11[%c0_31, %c0_32] : memref<128x128xf32, #tpu.memory_space<vmem>>, vector<128x128xf32>
    tpu.vector_store %arg11[%c0_31, %c0_32], %40 {strides = array<i32>} : memref<128x128xf32, #tpu.memory_space<vmem>>, vector<128x128xf32>,
    return
  }
}

</mosaic_0001>

<llo_original>
// kernel: tpu_custom_call.1
$region0: #{tpu_custom_call.1}
  #allocation0 [shape = 'u32[]', space=smem, size = 0x4, offset = 0x4, fixed_abs, tag = 'smem constant byte address 0x4 - core index']
  #allocation1 [shape = 'u32[72,128]{1,0:T(1,128)}', space=vmem, size = 0x9000, scoped, tag = 'internal scratch']
  %s0 = inlined_call_operand.vmem [shape: f32[128,128], index: 0, kind: input, shape index: {}]
  %s1 = inlined_call_operand.vmem [shape: f32[128,16], index: 1, kind: input, shape index: {}]
  %s2 = inlined_call_operand.vmem [shape: f32[16,128], index: 2, kind: input, shape index: {}]
  %s3 = inlined_call_operand.vmem [shape: f32[1,128], index: 3, kind: input, shape index: {}]
  %s4 = inlined_call_operand.hbm [shape: f32[16,128], index: 4, kind: input, shape index: {}]
  %s5 = inlined_call_operand.hbm [shape: f32[128,128], index: 5, kind: input, shape index: {}]
  %s6 = inlined_call_operand.vmem [shape: f32[1,128], index: 6, kind: input, shape index: {}]
  %s7 = inlined_call_operand.hbm [shape: f32[16,128], index: 7, kind: input, shape index: {}]
  %s8 = inlined_call_operand.hbm [shape: f32[128,128], index: 8, kind: input, shape index: {}]
  %s9 = inlined_call_operand.hbm [shape: f32[128,128], index: 9, kind: input, shape index: {}]
  %s10 = inlined_call_operand.vmem [shape: f32[1,128], index: 10, kind: input, shape index: {}]
  %s11 = inlined_call_operand.hbm [shape: f32[128,128], index: 11, kind: output, shape index: {}]
  %s12 = sld [smem:[#allocation0]]
  $region74: #{tpu_custom_call.1} parent=0
    _
  %s14 = ssub.s32 1, %s12
  %s15 = scalar_select 0, %s14, %s12
  $region1: #{tpu_custom_call.1} parent=0
    #allocation2 [shape = 'u8[8192]{0}', space=vmem, size = 0x2000, scoped, tag = 'input window, operand 4, single buffered']
    #allocation3 [shape = 's32[1]{0}', space=sflag, size = 0x4, scoped, tag = 'scoped memory for tpu_custom_call.1']
    #allocation4 [shape = 's32[1]{0}', space=sflag, size = 0x4, scoped, tag = 'scoped memory for tpu_custom_call.1']
    #allocation5 [shape = 'u8[65536]{0}', space=vmem, size = 0x10000, scoped, tag = 'input window, operand 5, single buffered']
    #allocation6 [shape = 's32[1]{0}', space=sflag, size = 0x4, scoped, tag = 'scoped memory for tpu_custom_call.1']
    #allocation7 [shape = 'u8[8192]{0}', space=vmem, size = 0x2000, scoped, tag = 'input window, operand 7, single buffered']
    #allocation8 [shape = 'u8[65536]{0}', space=vmem, size = 0x10000, scoped, tag = 'input window, operand 8, single buffered']
    #allocation9 [shape = 's32[1]{0}', space=sflag, size = 0x4, scoped, tag = 'scoped memory for tpu_custom_call.1']
    #allocation10 [shape = 'u8[65536]{0}', space=vmem, size = 0x10000, scoped, tag = 'input window, operand 9, single buffered']
    #allocation11 [shape = 'u8[65536]{0}', space=vmem, size = 0x10000, scoped, tag = 'output window, operand 0, single buffered']
    %16 = vsyncpa [#allocation3], 0
    %17 = vsyncpa [#allocation6], 0
    %18 = vsyncpa [#allocation9], 0
    %19 = vsyncpa [#allocation4], 0
    // Predicated region
    $region2: #{tpu_custom_call.1} parent=1 // pred_check
      _
    $region3: #{tpu_custom_call.1} parent=1 // pred_check_branch
      %21 = sbr.rel (0) target = $region5
    $region4: #{tpu_custom_call.1} parent=1 // pred_region
      _
    $region5: #{tpu_custom_call.1} parent=1 // pred_fallthru
      _
    // Predicated region
    $region6: #{tpu_custom_call.1} parent=1 // pred_check
      _
    $region7: #{tpu_custom_call.1} parent=1 // pred_check_branch
      %23 = sbr.rel (0) target = $region9
    $region8: #{tpu_custom_call.1} parent=1 // pred_region
      _
    $region9: #{tpu_custom_call.1} parent=1 // pred_fallthru
      _
    // Predicated region
    $region10: #{tpu_custom_call.1} parent=1 // pred_check
      _
    $region11: #{tpu_custom_call.1} parent=1 // pred_check_branch
      %25 = sbr.rel (0) target = $region13
    $region12: #{tpu_custom_call.1} parent=1 // pred_region
      _
    $region13: #{tpu_custom_call.1} parent=1 // pred_fallthru
      _
    // Predicated region
    $region14: #{tpu_custom_call.1} parent=1 // pred_check
      _
    $region15: #{tpu_custom_call.1} parent=1 // pred_check_branch
      %27 = sbr.rel (0) target = $region17
    $region16: #{tpu_custom_call.1} parent=1 // pred_region
      _
    $region17: #{tpu_custom_call.1} parent=1 // pred_fallthru
      _
    // Predicated region
    $region18: #{tpu_custom_call.1} parent=1 // pred_check
      _
    $region19: #{tpu_custom_call.1} parent=1 // pred_check_branch
      %29 = sbr.rel (0) target = $region21
    $region20: #{tpu_custom_call.1} parent=1 // pred_region
      %31 = vsyncadd [#allocation3], 0
      %s32 = sshll.u32 %s4, 4
      %s33 = int_to_ptr.hbm [resolvable:$true] %s32
      %s34 = sshll.u32 [#allocation2], 4
      %s35 = int_to_ptr.vmem [resolvable:$true] %s34
      %40 = dma.hbm_to_vmem [thread:$0]  %s33, 256, %s35, [#allocation3], 128, 128, 8
    $region21: #{tpu_custom_call.1} parent=1 // pred_fallthru
      _
    // Predicated region
    $region22: #{tpu_custom_call.1} parent=1 // pred_check
      _
    $region23: #{tpu_custom_call.1} parent=1 // pred_check_branch
      %42 = sbr.rel (0) target = $region25
    $region24: #{tpu_custom_call.1} parent=1 // pred_region
      %44 = vsyncadd [#allocation6], 0
      %s45 = sshll.u32 %s5, 4
      %s46 = int_to_ptr.hbm [resolvable:$true] %s45
      %s47 = sshll.u32 [#allocation5], 4
      %s48 = int_to_ptr.vmem [resolvable:$true] %s47
      %53 = dma.hbm_to_vmem [thread:$0]  %s46, 2048, %s48, [#allocation6], 128, 128, 8
    $region25: #{tpu_custom_call.1} parent=1 // pred_fallthru
      _
    // Predicated region
    $region26: #{tpu_custom_call.1} parent=1 // pred_check
      _
    $region27: #{tpu_custom_call.1} parent=1 // pred_check_branch
      %55 = sbr.rel (0) target = $region29
    $region28: #{tpu_custom_call.1} parent=1 // pred_region
      _
    $region29: #{tpu_custom_call.1} parent=1 // pred_fallthru
      _
    // Predicated region
    $region30: #{tpu_custom_call.1} parent=1 // pred_check
      _
    $region31: #{tpu_custom_call.1} parent=1 // pred_check_branch
      %57 = sbr.rel (0) target = $region33
    $region32: #{tpu_custom_call.1} parent=1 // pred_region
      %59 = vsyncadd [#allocation6], 0
      %s60 = sshll.u32 %s7, 4
      %s61 = int_to_ptr.hbm [resolvable:$true] %s60
      %s62 = sshll.u32 [#allocation7], 4
      %s63 = int_to_ptr.vmem [resolvable:$true] %s62
      %68 = dma.hbm_to_vmem [thread:$0]  %s61, 256, %s63, [#allocation6], 128, 128, 8
    $region33: #{tpu_custom_call.1} parent=1 // pred_fallthru
      _
    // Predicated region
    $region34: #{tpu_custom_call.1} parent=1 // pred_check
      _
    $region35: #{tpu_custom_call.1} parent=1 // pred_check_branch
      %70 = sbr.rel (0) target = $region37
    $region36: #{tpu_custom_call.1} parent=1 // pred_region
      %72 = vsyncadd [#allocation9], 0
      %s73 = sshll.u32 %s8, 4
      %s74 = int_to_ptr.hbm [resolvable:$true] %s73
      %s75 = sshll.u32 [#allocation8], 4
      %s76 = int_to_ptr.vmem [resolvable:$true] %s75
      %81 = dma.hbm_to_vmem [thread:$0]  %s74, 2048, %s76, [#allocation9], 128, 128, 8
    $region37: #{tpu_custom_call.1} parent=1 // pred_fallthru
      _
    // Predicated region
    $region38: #{tpu_custom_call.1} parent=1 // pred_check
      _
    $region39: #{tpu_custom_call.1} parent=1 // pred_check_branch
      %83 = sbr.rel (0) target = $region41
    $region40: #{tpu_custom_call.1} parent=1 // pred_region
      %85 = vsyncadd [#allocation9], 0
      %s86 = sshll.u32 %s9, 4
      %s87 = int_to_ptr.hbm [resolvable:$true] %s86
      %s88 = sshll.u32 [#allocation10], 4
      %s89 = int_to_ptr.vmem [resolvable:$true] %s88
      %94 = dma.hbm_to_vmem [thread:$0]  %s87, 2048, %s89, [#allocation9], 128, 128, 8
    $region41: #{tpu_custom_call.1} parent=1 // pred_fallthru
      _
    // Predicated region
    $region42: #{tpu_custom_call.1} parent=1 // pred_check
      _
    $region43: #{tpu_custom_call.1} parent=1 // pred_check_branch
      %96 = sbr.rel (0) target = $region45
    $region44: #{tpu_custom_call.1} parent=1 // pred_region
      _
    $region45: #{tpu_custom_call.1} parent=1 // pred_fallthru
      _
    // Predicated region
    $region46: #{tpu_custom_call.1} parent=1 // pred_check
      _
    $region47: #{tpu_custom_call.1} parent=1 // pred_check_branch
      %98 = sbr.rel (0) target = $region49
    $region48: #{tpu_custom_call.1} parent=1 // pred_region
      %100 = dma.done [#allocation3], 256
    $region49: #{tpu_custom_call.1} parent=1 // pred_fallthru
      _
    // Predicated region
    $region50: #{tpu_custom_call.1} parent=1 // pred_check
      _
    $region51: #{tpu_custom_call.1} parent=1 // pred_check_branch
      %102 = sbr.rel (0) target = $region53
    $region52: #{tpu_custom_call.1} parent=1 // pred_region
      %104 = dma.done [#allocation6], 2048
    $region53: #{tpu_custom_call.1} parent=1 // pred_fallthru
      _
    // Predicated region
    $region54: #{tpu_custom_call.1} parent=1 // pred_check
      _
    $region55: #{tpu_custom_call.1} parent=1 // pred_check_branch
      %106 = sbr.rel (0) target = $region57
    $region56: #{tpu_custom_call.1} parent=1 // pred_region
      %108 = dma.done [#allocation6], 256
    $region57: #{tpu_custom_call.1} parent=1 // pred_fallthru
      _
    // Predicated region
    $region58: #{tpu_custom_call.1} parent=1 // pred_check
      _
    $region59: #{tpu_custom_call.1} parent=1 // pred_check_branch
      %110 = sbr.rel (0) target = $region61
    $region60: #{tpu_custom_call.1} parent=1 // pred_region
      %112 = dma.done [#allocation9], 2048
    $region61: #{tpu_custom_call.1} parent=1 // pred_fallthru
      _
    // Predicated region
    $region62: #{tpu_custom_call.1} parent=1 // pred_check
      _
    $region63: #{tpu_custom_call.1} parent=1 // pred_check_branch
      %114 = sbr.rel (0) target = $region65
    $region64: #{tpu_custom_call.1} parent=1 // pred_region
      %116 = dma.done [#allocation9], 2048
    $region65: #{tpu_custom_call.1} parent=1 // pred_fallthru
      _
    %v117 = vld [vmem:[%s0] sm:$0xff]
    %v118 = vld [vmem:[%s0 + $0x8] sm:$0xff]
    %v119 = vld [vmem:[%s0 + $0x10] sm:$0xff]
    %v120 = vld [vmem:[%s0 + $0x18] sm:$0xff]
    %v121 = vld [vmem:[%s0 + $0x20] sm:$0xff]
    %v122 = vld [vmem:[%s0 + $0x28] sm:$0xff]
    %v123 = vld [vmem:[%s0 + $0x30] sm:$0xff]
    %v124 = vld [vmem:[%s0 + $0x38] sm:$0xff]
    %v125 = vld [vmem:[%s0 + $0x40] sm:$0xff]
    %v126 = vld [vmem:[%s0 + $0x48] sm:$0xff]
    %v127 = vld [vmem:[%s0 + $0x50] sm:$0xff]
    %v128 = vld [vmem:[%s0 + $0x58] sm:$0xff]
    %v129 = vld [vmem:[%s0 + $0x60] sm:$0xff]
    %v130 = vld [vmem:[%s0 + $0x68] sm:$0xff]
    %v131 = vld [vmem:[%s0 + $0x70] sm:$0xff]
    %v132 = vld [vmem:[%s0 + $0x78] sm:$0xff]
    %v133 = vld [vmem:[%s1] sm:$0xff]
    %v134 = vld [vmem:[%s1 + $0x8] sm:$0xff]
    %v135 = vld [vmem:[%s1 + $0x10] sm:$0xff]
    %v136 = vld [vmem:[%s1 + $0x18] sm:$0xff]
    %v137 = vld [vmem:[%s1 + $0x20] sm:$0xff]
    %v138 = vld [vmem:[%s1 + $0x28] sm:$0xff]
    %v139 = vld [vmem:[%s1 + $0x30] sm:$0xff]
    %v140 = vld [vmem:[%s1 + $0x38] sm:$0xff]
    %v141 = vld [vmem:[%s1 + $0x40] sm:$0xff]
    %v142 = vld [vmem:[%s1 + $0x48] sm:$0xff]
    %v143 = vld [vmem:[%s1 + $0x50] sm:$0xff]
    %v144 = vld [vmem:[%s1 + $0x58] sm:$0xff]
    %v145 = vld [vmem:[%s1 + $0x60] sm:$0xff]
    %v146 = vld [vmem:[%s1 + $0x68] sm:$0xff]
    %v147 = vld [vmem:[%s1 + $0x70] sm:$0xff]
    %v148 = vld [vmem:[%s1 + $0x78] sm:$0xff]
    %v149 = vld [vmem:[%s2] sm:$0xff]
    %v150 = vld [vmem:[%s2 + $0x8] sm:$0xff]
    %vm151 = vcmask 130048
    %v153 = vsel %vm151, %v133, 0
    %v156 = vsel %vm151, %v134, 0
    %v159 = vsel %vm151, %v135, 0
    %v162 = vsel %vm151, %v136, 0
    %v165 = vsel %vm151, %v137, 0
    %v168 = vsel %vm151, %v138, 0
    %v171 = vsel %vm151, %v139, 0
    %v174 = vsel %vm151, %v140, 0
    %v177 = vsel %vm151, %v141, 0
    %v180 = vsel %vm151, %v142, 0
    %v183 = vsel %vm151, %v143, 0
    %v186 = vsel %vm151, %v144, 0
    %v189 = vsel %vm151, %v145, 0
    %v192 = vsel %vm151, %v146, 0
    %v195 = vsel %vm151, %v147, 0
    %v198 = vsel %vm151, %v148, 0
    %200 = vmatpush.msra.mxu0 0.0
    %201 = vmatpush.msra.mxu0 0.0
    %202 = vmatpush.msra.mxu0 0.0
    %203 = vmatpush.msra.mxu0 0.0
    %204 = vmatpush.msra.mxu0 0.0
    %205 = vmatpush.msra.mxu0 0.0
    %206 = vmatpush.msra.mxu0 0.0
    %207 = vmatpush.msra.mxu0 0.0
    %208 = vmatpush.msra.mxu0 0.0
    %209 = vmatpush.msra.mxu0 0.0
    %210 = vmatpush.msra.mxu0 0.0
    %211 = vmatpush.msra.mxu0 0.0
    %212 = vmatpush.msra.mxu0 0.0
    %213 = vmatpush.msra.mxu0 0.0
    %214 = vmatpush.msra.mxu0 %v150
    %215 = vmatpush.msra.mxu0 %v149
    %216 = vmatmul.f32.gmra.mxu0 %v153
    %v217 = vpop.f32.mrf.mxu0
    %v218 = vadd.f32 0.0, %v217
    %219 = vmatmul.f32.gmra.mxu0 %v156
    %v220 = vpop.f32.mrf.mxu0
    %v221 = vadd.f32 0.0, %v220
    %222 = vmatmul.f32.gmra.mxu0 %v159
    %v223 = vpop.f32.mrf.mxu0
    %v224 = vadd.f32 0.0, %v223
    %225 = vmatmul.f32.gmra.mxu0 %v162
    %v226 = vpop.f32.mrf.mxu0
    %v227 = vadd.f32 0.0, %v226
    %228 = vmatmul.f32.gmra.mxu0 %v165
    %v229 = vpop.f32.mrf.mxu0
    %v230 = vadd.f32 0.0, %v229
    %231 = vmatmul.f32.gmra.mxu0 %v168
    %v232 = vpop.f32.mrf.mxu0
    %v233 = vadd.f32 0.0, %v232
    %234 = vmatmul.f32.gmra.mxu0 %v171
    %v235 = vpop.f32.mrf.mxu0
    %v236 = vadd.f32 0.0, %v235
    %237 = vmatmul.f32.gmra.mxu0 %v174
    %v238 = vpop.f32.mrf.mxu0
    %v239 = vadd.f32 0.0, %v238
    %240 = vmatmul.f32.gmra.mxu0 %v177
    %v241 = vpop.f32.mrf.mxu0
    %v242 = vadd.f32 0.0, %v241
    %243 = vmatmul.f32.gmra.mxu0 %v180
    %v244 = vpop.f32.mrf.mxu0
    %v245 = vadd.f32 0.0, %v244
    %246 = vmatmul.f32.gmra.mxu0 %v183
    %v247 = vpop.f32.mrf.mxu0
    %v248 = vadd.f32 0.0, %v247
    %249 = vmatmul.f32.gmra.mxu0 %v186
    %v250 = vpop.f32.mrf.mxu0
    %v251 = vadd.f32 0.0, %v250
    %252 = vmatmul.f32.gmra.mxu0 %v189
    %v253 = vpop.f32.mrf.mxu0
    %v254 = vadd.f32 0.0, %v253
    %255 = vmatmul.f32.gmra.mxu0 %v192
    %v256 = vpop.f32.mrf.mxu0
    %v257 = vadd.f32 0.0, %v256
    %258 = vmatmul.f32.gmra.mxu0 %v195
    %v259 = vpop.f32.mrf.mxu0
    %v260 = vadd.f32 0.0, %v259
    %261 = vmatmul.f32.gmra.mxu0 %v198
    %v262 = vpop.f32.mrf.mxu0
    %v263 = vadd.f32 0.0, %v262
    %264 = vdwg.mxu0
    %v265 = vld [vmem:[%s3] sm:$0x1]
    %v267 = vperm.slane %v265, 0
    %269 = vmatpush.msra.mxu0 %v263
    %270 = vmatpush.msra.mxu0 %v260
    %271 = vmatpush.msra.mxu0 %v257
    %272 = vmatpush.msra.mxu0 %v254
    %273 = vmatpush.msra.mxu0 %v251
    %274 = vmatpush.msra.mxu0 %v248
    %275 = vmatpush.msra.mxu0 %v245
    %276 = vmatpush.msra.mxu0 %v242
    %277 = vmatpush.msra.mxu0 %v239
    %278 = vmatpush.msra.mxu0 %v236
    %279 = vmatpush.msra.mxu0 %v233
    %280 = vmatpush.msra.mxu0 %v230
    %281 = vmatpush.msra.mxu0 %v227
    %282 = vmatpush.msra.mxu0 %v224
    %283 = vmatpush.msra.mxu0 %v221
    %284 = vmatpush.msra.mxu0 %v218
    %285 = vmatmul.f32.gmra.mxu0 %v117
    %v286 = vpop.f32.mrf.mxu0
    %v287 = vadd.f32 %v267, %v286
    %288 = vmatmul.f32.gmra.mxu0 %v118
    %v289 = vpop.f32.mrf.mxu0
    %v290 = vadd.f32 %v267, %v289
    %291 = vmatmul.f32.gmra.mxu0 %v119
    %v292 = vpop.f32.mrf.mxu0
    %v293 = vadd.f32 %v267, %v292
    %294 = vmatmul.f32.gmra.mxu0 %v120
    %v295 = vpop.f32.mrf.mxu0
    %v296 = vadd.f32 %v267, %v295
    %297 = vmatmul.f32.gmra.mxu0 %v121
    %v298 = vpop.f32.mrf.mxu0
    %v299 = vadd.f32 %v267, %v298
    %300 = vmatmul.f32.gmra.mxu0 %v122
    %v301 = vpop.f32.mrf.mxu0
    %v302 = vadd.f32 %v267, %v301
    %303 = vmatmul.f32.gmra.mxu0 %v123
    %v304 = vpop.f32.mrf.mxu0
    %v305 = vadd.f32 %v267, %v304
    %306 = vmatmul.f32.gmra.mxu0 %v124
    %v307 = vpop.f32.mrf.mxu0
    %v308 = vadd.f32 %v267, %v307
    %309 = vmatmul.f32.gmra.mxu0 %v125
    %v310 = vpop.f32.mrf.mxu0
    %v311 = vadd.f32 %v267, %v310
    %312 = vmatmul.f32.gmra.mxu0 %v126
    %v313 = vpop.f32.mrf.mxu0
    %v314 = vadd.f32 %v267, %v313
    %315 = vmatmul.f32.gmra.mxu0 %v127
    %v316 = vpop.f32.mrf.mxu0
    %v317 = vadd.f32 %v267, %v316
    %318 = vmatmul.f32.gmra.mxu0 %v128
    %v319 = vpop.f32.mrf.mxu0
    %v320 = vadd.f32 %v267, %v319
    %321 = vmatmul.f32.gmra.mxu0 %v129
    %v322 = vpop.f32.mrf.mxu0
    %v323 = vadd.f32 %v267, %v322
    %324 = vmatmul.f32.gmra.mxu0 %v130
    %v325 = vpop.f32.mrf.mxu0
    %v326 = vadd.f32 %v267, %v325
    %327 = vmatmul.f32.gmra.mxu0 %v131
    %v328 = vpop.f32.mrf.mxu0
    %v329 = vadd.f32 %v267, %v328
    %330 = vmatmul.f32.gmra.mxu0 %v132
    %v331 = vpop.f32.mrf.mxu0
    %v332 = vadd.f32 %v267, %v331
    %333 = vdwg.mxu0
    %v334 = vtanh.pop %v287
    %v335 = vtanh.pop %v290
    %v336 = vtanh.pop %v293
    %v337 = vtanh.pop %v296
    %v338 = vtanh.pop %v299
    %v339 = vtanh.pop %v302
    %v340 = vtanh.pop %v305
    %v341 = vtanh.pop %v308
    %v342 = vtanh.pop %v311
    %v343 = vtanh.pop %v314
    %v344 = vtanh.pop %v317
    %v345 = vtanh.pop %v320
    %v346 = vtanh.pop %v323
    %v347 = vtanh.pop %v326
    %v348 = vtanh.pop %v329
    %v349 = vtanh.pop %v332
    %v350 = vld [vmem:[#allocation2] sm:$0xff]
    %v351 = vld [vmem:[#allocation2 + $0x8] sm:$0xff]
    %v352 = vld [vmem:[#allocation5] sm:$0xff]
    %v353 = vld [vmem:[#allocation5 + $0x8] sm:$0xff]
    %v354 = vld [vmem:[#allocation5 + $0x10] sm:$0xff]
    %v355 = vld [vmem:[#allocation5 + $0x18] sm:$0xff]
    %v356 = vld [vmem:[#allocation5 + $0x20] sm:$0xff]
    %v357 = vld [vmem:[#allocation5 + $0x28] sm:$0xff]
    %v358 = vld [vmem:[#allocation5 + $0x30] sm:$0xff]
    %v359 = vld [vmem:[#allocation5 + $0x38] sm:$0xff]
    %v360 = vld [vmem:[#allocation5 + $0x40] sm:$0xff]
    %v361 = vld [vmem:[#allocation5 + $0x48] sm:$0xff]
    %v362 = vld [vmem:[#allocation5 + $0x50] sm:$0xff]
    %v363 = vld [vmem:[#allocation5 + $0x58] sm:$0xff]
    %v364 = vld [vmem:[#allocation5 + $0x60] sm:$0xff]
    %v365 = vld [vmem:[#allocation5 + $0x68] sm:$0xff]
    %v366 = vld [vmem:[#allocation5 + $0x70] sm:$0xff]
    %v367 = vld [vmem:[#allocation5 + $0x78] sm:$0xff]
    %368 = vmatpush.msra.mxu0 %v367
    %369 = vmatpush.msra.mxu0 %v366
    %370 = vmatpush.msra.mxu0 %v365
    %371 = vmatpush.msra.mxu0 %v364
    %372 = vmatpush.msra.mxu0 %v363
    %373 = vmatpush.msra.mxu0 %v362
    %374 = vmatpush.msra.mxu0 %v361
    %375 = vmatpush.msra.mxu0 %v360
    %376 = vmatpush.msra.mxu0 %v359
    %377 = vmatpush.msra.mxu0 %v358
    %378 = vmatpush.msra.mxu0 %v357
    %379 = vmatpush.msra.mxu0 %v356
    %380 = vmatpush.msra.mxu0 %v355
    %381 = vmatpush.msra.mxu0 %v354
    %382 = vmatpush.msra.mxu0 %v353
    %383 = vmatpush.msra.mxu0 %v352
    %384 = vmatmul.f32.gmra.mxu0 %v334
    %v385 = vpop.f32.mrf.mxu0
    %v386 = vadd.f32 0.0, %v385
    %387 = vmatmul.f32.gmra.mxu0 %v335
    %v388 = vpop.f32.mrf.mxu0
    %v389 = vadd.f32 0.0, %v388
    %390 = vmatmul.f32.gmra.mxu0 %v336
    %v391 = vpop.f32.mrf.mxu0
    %v392 = vadd.f32 0.0, %v391
    %393 = vmatmul.f32.gmra.mxu0 %v337
    %v394 = vpop.f32.mrf.mxu0
    %v395 = vadd.f32 0.0, %v394
    %396 = vmatmul.f32.gmra.mxu0 %v338
    %v397 = vpop.f32.mrf.mxu0
    %v398 = vadd.f32 0.0, %v397
    %399 = vmatmul.f32.gmra.mxu0 %v339
    %v400 = vpop.f32.mrf.mxu0
    %v401 = vadd.f32 0.0, %v400
    %402 = vmatmul.f32.gmra.mxu0 %v340
    %v403 = vpop.f32.mrf.mxu0
    %v404 = vadd.f32 0.0, %v403
    %405 = vmatmul.f32.gmra.mxu0 %v341
    %v406 = vpop.f32.mrf.mxu0
    %v407 = vadd.f32 0.0, %v406
    %408 = vmatmul.f32.gmra.mxu0 %v342
    %v409 = vpop.f32.mrf.mxu0
    %v410 = vadd.f32 0.0, %v409
    %411 = vmatmul.f32.gmra.mxu0 %v343
    %v412 = vpop.f32.mrf.mxu0
    %v413 = vadd.f32 0.0, %v412
    %414 = vmatmul.f32.gmra.mxu0 %v344
    %v415 = vpop.f32.mrf.mxu0
    %v416 = vadd.f32 0.0, %v415
    %417 = vmatmul.f32.gmra.mxu0 %v345
    %v418 = vpop.f32.mrf.mxu0
    %v419 = vadd.f32 0.0, %v418
    %420 = vmatmul.f32.gmra.mxu0 %v346
    %v421 = vpop.f32.mrf.mxu0
    %v422 = vadd.f32 0.0, %v421
    %423 = vmatmul.f32.gmra.mxu0 %v347
    %v424 = vpop.f32.mrf.mxu0
    %v425 = vadd.f32 0.0, %v424
    %426 = vmatmul.f32.gmra.mxu0 %v348
    %v427 = vpop.f32.mrf.mxu0
    %v428 = vadd.f32 0.0, %v427
    %429 = vmatmul.f32.gmra.mxu0 %v349
    %v430 = vpop.f32.mrf.mxu0
    %v431 = vadd.f32 0.0, %v430
    %432 = vdwg.mxu0
    %433 = vmatpush.msra.mxu0 0.0
    %434 = vmatpush.msra.mxu0 0.0
    %435 = vmatpush.msra.mxu0 0.0
    %436 = vmatpush.msra.mxu0 0.0
    %437 = vmatpush.msra.mxu0 0.0
    %438 = vmatpush.msra.mxu0 0.0
    %439 = vmatpush.msra.mxu0 0.0
    %440 = vmatpush.msra.mxu0 0.0
    %441 = vmatpush.msra.mxu0 0.0
    %442 = vmatpush.msra.mxu0 0.0
    %443 = vmatpush.msra.mxu0 0.0
    %444 = vmatpush.msra.mxu0 0.0
    %445 = vmatpush.msra.mxu0 0.0
    %446 = vmatpush.msra.mxu0 0.0
    %447 = vmatpush.msra.mxu0 %v351
    %448 = vmatpush.msra.mxu0 %v350
    %449 = vmatmul.f32.gmra.mxu0 %v153
    %v450 = vpop.f32.mrf.mxu0
    %v451 = vadd.f32 %v386, %v450
    %452 = vmatmul.f32.gmra.mxu0 %v156
    %v453 = vpop.f32.mrf.mxu0
    %v454 = vadd.f32 %v389, %v453
    %455 = vmatmul.f32.gmra.mxu0 %v159
    %v456 = vpop.f32.mrf.mxu0
    %v457 = vadd.f32 %v392, %v456
    %458 = vmatmul.f32.gmra.mxu0 %v162
    %v459 = vpop.f32.mrf.mxu0
    %v460 = vadd.f32 %v395, %v459
    %461 = vmatmul.f32.gmra.mxu0 %v165
    %v462 = vpop.f32.mrf.mxu0
    %v463 = vadd.f32 %v398, %v462
    %464 = vmatmul.f32.gmra.mxu0 %v168
    %v465 = vpop.f32.mrf.mxu0
    %v466 = vadd.f32 %v401, %v465
    %467 = vmatmul.f32.gmra.mxu0 %v171
    %v468 = vpop.f32.mrf.mxu0
    %v469 = vadd.f32 %v404, %v468
    %470 = vmatmul.f32.gmra.mxu0 %v174
    %v471 = vpop.f32.mrf.mxu0
    %v472 = vadd.f32 %v407, %v471
    %473 = vmatmul.f32.gmra.mxu0 %v177
    %v474 = vpop.f32.mrf.mxu0
    %v475 = vadd.f32 %v410, %v474
    %476 = vmatmul.f32.gmra.mxu0 %v180
    %v477 = vpop.f32.mrf.mxu0
    %v478 = vadd.f32 %v413, %v477
    %479 = vmatmul.f32.gmra.mxu0 %v183
    %v480 = vpop.f32.mrf.mxu0
    %v481 = vadd.f32 %v416, %v480
    %482 = vmatmul.f32.gmra.mxu0 %v186
    %v483 = vpop.f32.mrf.mxu0
    %v484 = vadd.f32 %v419, %v483
    %485 = vmatmul.f32.gmra.mxu0 %v189
    %v486 = vpop.f32.mrf.mxu0
    %v487 = vadd.f32 %v422, %v486
    %488 = vmatmul.f32.gmra.mxu0 %v192
    %v489 = vpop.f32.mrf.mxu0
    %v490 = vadd.f32 %v425, %v489
    %491 = vmatmul.f32.gmra.mxu0 %v195
    %v492 = vpop.f32.mrf.mxu0
    %v493 = vadd.f32 %v428, %v492
    %494 = vmatmul.f32.gmra.mxu0 %v198
    %v495 = vpop.f32.mrf.mxu0
    %v496 = vadd.f32 %v431, %v495
    %497 = vdwg.mxu0
    %v498 = vld [vmem:[%s6] sm:$0x1]
    %v500 = vperm.slane %v498, 0
    %502 = vmatpush.msra.mxu0 %v496
    %503 = vmatpush.msra.mxu0 %v493
    %504 = vmatpush.msra.mxu0 %v490
    %505 = vmatpush.msra.mxu0 %v487
    %506 = vmatpush.msra.mxu0 %v484
    %507 = vmatpush.msra.mxu0 %v481
    %508 = vmatpush.msra.mxu0 %v478
    %509 = vmatpush.msra.mxu0 %v475
    %510 = vmatpush.msra.mxu0 %v472
    %511 = vmatpush.msra.mxu0 %v469
    %512 = vmatpush.msra.mxu0 %v466
    %513 = vmatpush.msra.mxu0 %v463
    %514 = vmatpush.msra.mxu0 %v460
    %515 = vmatpush.msra.mxu0 %v457
    %516 = vmatpush.msra.mxu0 %v454
    %517 = vmatpush.msra.mxu0 %v451
    %518 = vmatmul.f32.gmra.mxu0 %v117
    %v519 = vpop.f32.mrf.mxu0
    %v520 = vadd.f32 %v500, %v519
    %521 = vmatmul.f32.gmra.mxu0 %v118
    %v522 = vpop.f32.mrf.mxu0
    %v523 = vadd.f32 %v500, %v522
    %524 = vmatmul.f32.gmra.mxu0 %v119
    %v525 = vpop.f32.mrf.mxu0
    %v526 = vadd.f32 %v500, %v525
    %527 = vmatmul.f32.gmra.mxu0 %v120
    %v528 = vpop.f32.mrf.mxu0
    %v529 = vadd.f32 %v500, %v528
    %530 = vmatmul.f32.gmra.mxu0 %v121
    %v531 = vpop.f32.mrf.mxu0
    %v532 = vadd.f32 %v500, %v531
    %533 = vmatmul.f32.gmra.mxu0 %v122
    %v534 = vpop.f32.mrf.mxu0
    %v535 = vadd.f32 %v500, %v534
    %536 = vmatmul.f32.gmra.mxu0 %v123
    %v537 = vpop.f32.mrf.mxu0
    %v538 = vadd.f32 %v500, %v537
    %539 = vmatmul.f32.gmra.mxu0 %v124
    %v540 = vpop.f32.mrf.mxu0
    %v541 = vadd.f32 %v500, %v540
    %542 = vmatmul.f32.gmra.mxu0 %v125
    %v543 = vpop.f32.mrf.mxu0
    %v544 = vadd.f32 %v500, %v543
    %545 = vmatmul.f32.gmra.mxu0 %v126
    %v546 = vpop.f32.mrf.mxu0
    %v547 = vadd.f32 %v500, %v546
    %548 = vmatmul.f32.gmra.mxu0 %v127
    %v549 = vpop.f32.mrf.mxu0
    %v550 = vadd.f32 %v500, %v549
    %551 = vmatmul.f32.gmra.mxu0 %v128
    %v552 = vpop.f32.mrf.mxu0
    %v553 = vadd.f32 %v500, %v552
    %554 = vmatmul.f32.gmra.mxu0 %v129
    %v555 = vpop.f32.mrf.mxu0
    %v556 = vadd.f32 %v500, %v555
    %557 = vmatmul.f32.gmra.mxu0 %v130
    %v558 = vpop.f32.mrf.mxu0
    %v559 = vadd.f32 %v500, %v558
    %560 = vmatmul.f32.gmra.mxu0 %v131
    %v561 = vpop.f32.mrf.mxu0
    %v562 = vadd.f32 %v500, %v561
    %563 = vmatmul.f32.gmra.mxu0 %v132
    %v564 = vpop.f32.mrf.mxu0
    %v565 = vadd.f32 %v500, %v564
    %566 = vdwg.mxu0
    %v567 = vtanh.pop %v520
    %v568 = vtanh.pop %v523
    %v569 = vtanh.pop %v526
    %v570 = vtanh.pop %v529
    %v571 = vtanh.pop %v532
    %v572 = vtanh.pop %v535
    %v573 = vtanh.pop %v538
    %v574 = vtanh.pop %v541
    %v575 = vtanh.pop %v544
    %v576 = vtanh.pop %v547
    %v577 = vtanh.pop %v550
    %v578 = vtanh.pop %v553
    %v579 = vtanh.pop %v556
    %v580 = vtanh.pop %v559
    %v581 = vtanh.pop %v562
    %v582 = vtanh.pop %v565
    %v583 = vld [vmem:[#allocation7] sm:$0xff]
    %v584 = vld [vmem:[#allocation7 + $0x8] sm:$0xff]
    %v585 = vld [vmem:[#allocation8] sm:$0xff]
    %v586 = vld [vmem:[#allocation8 + $0x8] sm:$0xff]
    %v587 = vld [vmem:[#allocation8 + $0x10] sm:$0xff]
    %v588 = vld [vmem:[#allocation8 + $0x18] sm:$0xff]
    %v589 = vld [vmem:[#allocation8 + $0x20] sm:$0xff]
    %v590 = vld [vmem:[#allocation8 + $0x28] sm:$0xff]
    %v591 = vld [vmem:[#allocation8 + $0x30] sm:$0xff]
    %v592 = vld [vmem:[#allocation8 + $0x38] sm:$0xff]
    %v593 = vld [vmem:[#allocation8 + $0x40] sm:$0xff]
    %v594 = vld [vmem:[#allocation8 + $0x48] sm:$0xff]
    %v595 = vld [vmem:[#allocation8 + $0x50] sm:$0xff]
    %v596 = vld [vmem:[#allocation8 + $0x58] sm:$0xff]
    %v597 = vld [vmem:[#allocation8 + $0x60] sm:$0xff]
    %v598 = vld [vmem:[#allocation8 + $0x68] sm:$0xff]
    %v599 = vld [vmem:[#allocation8 + $0x70] sm:$0xff]
    %v600 = vld [vmem:[#allocation8 + $0x78] sm:$0xff]
    %601 = vmatpush.msra.mxu0 %v600
    %602 = vmatpush.msra.mxu0 %v599
    %603 = vmatpush.msra.mxu0 %v598
    %604 = vmatpush.msra.mxu0 %v597
    %605 = vmatpush.msra.mxu0 %v596
    %606 = vmatpush.msra.mxu0 %v595
    %607 = vmatpush.msra.mxu0 %v594
    %608 = vmatpush.msra.mxu0 %v593
    %609 = vmatpush.msra.mxu0 %v592
    %610 = vmatpush.msra.mxu0 %v591
    %611 = vmatpush.msra.mxu0 %v590
    %612 = vmatpush.msra.mxu0 %v589
    %613 = vmatpush.msra.mxu0 %v588
    %614 = vmatpush.msra.mxu0 %v587
    %615 = vmatpush.msra.mxu0 %v586
    %616 = vmatpush.msra.mxu0 %v585
    %617 = vmatmul.f32.gmra.mxu0 %v334
    %v618 = vpop.f32.mrf.mxu0
    %v619 = vadd.f32 0.0, %v618
    %620 = vmatmul.f32.gmra.mxu0 %v335
    %v621 = vpop.f32.mrf.mxu0
    %v622 = vadd.f32 0.0, %v621
    %623 = vmatmul.f32.gmra.mxu0 %v336
    %v624 = vpop.f32.mrf.mxu0
    %v625 = vadd.f32 0.0, %v624
    %626 = vmatmul.f32.gmra.mxu0 %v337
    %v627 = vpop.f32.mrf.mxu0
    %v628 = vadd.f32 0.0, %v627
    %629 = vmatmul.f32.gmra.mxu0 %v338
    %v630 = vpop.f32.mrf.mxu0
    %v631 = vadd.f32 0.0, %v630
    %632 = vmatmul.f32.gmra.mxu0 %v339
    %v633 = vpop.f32.mrf.mxu0
    %v634 = vadd.f32 0.0, %v633
    %635 = vmatmul.f32.gmra.mxu0 %v340
    %v636 = vpop.f32.mrf.mxu0
    %v637 = vadd.f32 0.0, %v636
    %638 = vmatmul.f32.gmra.mxu0 %v341
    %v639 = vpop.f32.mrf.mxu0
    %v640 = vadd.f32 0.0, %v639
    %641 = vmatmul.f32.gmra.mxu0 %v342
    %v642 = vpop.f32.mrf.mxu0
    %v643 = vadd.f32 0.0, %v642
    %644 = vmatmul.f32.gmra.mxu0 %v343
    %v645 = vpop.f32.mrf.mxu0
    %v646 = vadd.f32 0.0, %v645
    %647 = vmatmul.f32.gmra.mxu0 %v344
    %v648 = vpop.f32.mrf.mxu0
    %v649 = vadd.f32 0.0, %v648
    %650 = vmatmul.f32.gmra.mxu0 %v345
    %v651 = vpop.f32.mrf.mxu0
    %v652 = vadd.f32 0.0, %v651
    %653 = vmatmul.f32.gmra.mxu0 %v346
    %v654 = vpop.f32.mrf.mxu0
    %v655 = vadd.f32 0.0, %v654
    %656 = vmatmul.f32.gmra.mxu0 %v347
    %v657 = vpop.f32.mrf.mxu0
    %v658 = vadd.f32 0.0, %v657
    %659 = vmatmul.f32.gmra.mxu0 %v348
    %v660 = vpop.f32.mrf.mxu0
    %v661 = vadd.f32 0.0, %v660
    %662 = vmatmul.f32.gmra.mxu0 %v349
    %v663 = vpop.f32.mrf.mxu0
    %v664 = vadd.f32 0.0, %v663
    %665 = vdwg.mxu0
    %666 = vmatpush.msra.mxu0 0.0
    %667 = vmatpush.msra.mxu0 0.0
    %668 = vmatpush.msra.mxu0 0.0
    %669 = vmatpush.msra.mxu0 0.0
    %670 = vmatpush.msra.mxu0 0.0
    %671 = vmatpush.msra.mxu0 0.0
    %672 = vmatpush.msra.mxu0 0.0
    %673 = vmatpush.msra.mxu0 0.0
    %674 = vmatpush.msra.mxu0 0.0
    %675 = vmatpush.msra.mxu0 0.0
    %676 = vmatpush.msra.mxu0 0.0
    %677 = vmatpush.msra.mxu0 0.0
    %678 = vmatpush.msra.mxu0 0.0
    %679 = vmatpush.msra.mxu0 0.0
    %680 = vmatpush.msra.mxu0 %v584
    %681 = vmatpush.msra.mxu0 %v583
    %682 = vmatmul.f32.gmra.mxu0 %v153
    %v683 = vpop.f32.mrf.mxu0
    %v684 = vadd.f32 %v619, %v683
    %685 = vmatmul.f32.gmra.mxu0 %v156
    %v686 = vpop.f32.mrf.mxu0
    %v687 = vadd.f32 %v622, %v686
    %688 = vmatmul.f32.gmra.mxu0 %v159
    %v689 = vpop.f32.mrf.mxu0
    %v690 = vadd.f32 %v625, %v689
    %691 = vmatmul.f32.gmra.mxu0 %v162
    %v692 = vpop.f32.mrf.mxu0
    %v693 = vadd.f32 %v628, %v692
    %694 = vmatmul.f32.gmra.mxu0 %v165
    %v695 = vpop.f32.mrf.mxu0
    %v696 = vadd.f32 %v631, %v695
    %697 = vmatmul.f32.gmra.mxu0 %v168
    %v698 = vpop.f32.mrf.mxu0
    %v699 = vadd.f32 %v634, %v698
    %700 = vmatmul.f32.gmra.mxu0 %v171
    %v701 = vpop.f32.mrf.mxu0
    %v702 = vadd.f32 %v637, %v701
    %703 = vmatmul.f32.gmra.mxu0 %v174
    %v704 = vpop.f32.mrf.mxu0
    %v705 = vadd.f32 %v640, %v704
    %706 = vmatmul.f32.gmra.mxu0 %v177
    %v707 = vpop.f32.mrf.mxu0
    %v708 = vadd.f32 %v643, %v707
    %709 = vmatmul.f32.gmra.mxu0 %v180
    %v710 = vpop.f32.mrf.mxu0
    %v711 = vadd.f32 %v646, %v710
    %712 = vmatmul.f32.gmra.mxu0 %v183
    %v713 = vpop.f32.mrf.mxu0
    %v714 = vadd.f32 %v649, %v713
    %715 = vmatmul.f32.gmra.mxu0 %v186
    %v716 = vpop.f32.mrf.mxu0
    %v717 = vadd.f32 %v652, %v716
    %718 = vmatmul.f32.gmra.mxu0 %v189
    %v719 = vpop.f32.mrf.mxu0
    %v720 = vadd.f32 %v655, %v719
    %721 = vmatmul.f32.gmra.mxu0 %v192
    %v722 = vpop.f32.mrf.mxu0
    %v723 = vadd.f32 %v658, %v722
    %724 = vmatmul.f32.gmra.mxu0 %v195
    %v725 = vpop.f32.mrf.mxu0
    %v726 = vadd.f32 %v661, %v725
    %727 = vmatmul.f32.gmra.mxu0 %v198
    %v728 = vpop.f32.mrf.mxu0
    %v729 = vadd.f32 %v664, %v728
    %730 = vdwg.mxu0
    %v731 = vld [vmem:[#allocation10] sm:$0xff]
    %v732 = vld [vmem:[#allocation10 + $0x8] sm:$0xff]
    %v733 = vld [vmem:[#allocation10 + $0x10] sm:$0xff]
    %v734 = vld [vmem:[#allocation10 + $0x18] sm:$0xff]
    %v735 = vld [vmem:[#allocation10 + $0x20] sm:$0xff]
    %v736 = vld [vmem:[#allocation10 + $0x28] sm:$0xff]
    %v737 = vld [vmem:[#allocation10 + $0x30] sm:$0xff]
    %v738 = vld [vmem:[#allocation10 + $0x38] sm:$0xff]
    %v739 = vld [vmem:[#allocation10 + $0x40] sm:$0xff]
    %v740 = vld [vmem:[#allocation10 + $0x48] sm:$0xff]
    %v741 = vld [vmem:[#allocation10 + $0x50] sm:$0xff]
    %v742 = vld [vmem:[#allocation10 + $0x58] sm:$0xff]
    %v743 = vld [vmem:[#allocation10 + $0x60] sm:$0xff]
    %v744 = vld [vmem:[#allocation10 + $0x68] sm:$0xff]
    %v745 = vld [vmem:[#allocation10 + $0x70] sm:$0xff]
    %v746 = vld [vmem:[#allocation10 + $0x78] sm:$0xff]
    %747 = vmatpush.msra.mxu0 %v746
    %748 = vmatpush.msra.mxu0 %v745
    %749 = vmatpush.msra.mxu0 %v744
    %750 = vmatpush.msra.mxu0 %v743
    %751 = vmatpush.msra.mxu0 %v742
    %752 = vmatpush.msra.mxu0 %v741
    %753 = vmatpush.msra.mxu0 %v740
    %754 = vmatpush.msra.mxu0 %v739
    %755 = vmatpush.msra.mxu0 %v738
    %756 = vmatpush.msra.mxu0 %v737
    %757 = vmatpush.msra.mxu0 %v736
    %758 = vmatpush.msra.mxu0 %v735
    %759 = vmatpush.msra.mxu0 %v734
    %760 = vmatpush.msra.mxu0 %v733
    %761 = vmatpush.msra.mxu0 %v732
    %762 = vmatpush.msra.mxu0 %v731
    %763 = vmatmul.f32.gmra.mxu0 %v567
    %v764 = vpop.f32.mrf.mxu0
    %v765 = vadd.f32 0.0, %v764
    %766 = vmatmul.f32.gmra.mxu0 %v568
    %v767 = vpop.f32.mrf.mxu0
    %v768 = vadd.f32 0.0, %v767
    %769 = vmatmul.f32.gmra.mxu0 %v569
    %v770 = vpop.f32.mrf.mxu0
    %v771 = vadd.f32 0.0, %v770
    %772 = vmatmul.f32.gmra.mxu0 %v570
    %v773 = vpop.f32.mrf.mxu0
    %v774 = vadd.f32 0.0, %v773
    %775 = vmatmul.f32.gmra.mxu0 %v571
    %v776 = vpop.f32.mrf.mxu0
    %v777 = vadd.f32 0.0, %v776
    %778 = vmatmul.f32.gmra.mxu0 %v572
    %v779 = vpop.f32.mrf.mxu0
    %v780 = vadd.f32 0.0, %v779
    %781 = vmatmul.f32.gmra.mxu0 %v573
    %v782 = vpop.f32.mrf.mxu0
    %v783 = vadd.f32 0.0, %v782
    %784 = vmatmul.f32.gmra.mxu0 %v574
    %v785 = vpop.f32.mrf.mxu0
    %v786 = vadd.f32 0.0, %v785
    %787 = vmatmul.f32.gmra.mxu0 %v575
    %v788 = vpop.f32.mrf.mxu0
    %v789 = vadd.f32 0.0, %v788
    %790 = vmatmul.f32.gmra.mxu0 %v576
    %v791 = vpop.f32.mrf.mxu0
    %v792 = vadd.f32 0.0, %v791
    %793 = vmatmul.f32.gmra.mxu0 %v577
    %v794 = vpop.f32.mrf.mxu0
    %v795 = vadd.f32 0.0, %v794
    %796 = vmatmul.f32.gmra.mxu0 %v578
    %v797 = vpop.f32.mrf.mxu0
    %v798 = vadd.f32 0.0, %v797
    %799 = vmatmul.f32.gmra.mxu0 %v579
    %v800 = vpop.f32.mrf.mxu0
    %v801 = vadd.f32 0.0, %v800
    %802 = vmatmul.f32.gmra.mxu0 %v580
    %v803 = vpop.f32.mrf.mxu0
    %v804 = vadd.f32 0.0, %v803
    %805 = vmatmul.f32.gmra.mxu0 %v581
    %v806 = vpop.f32.mrf.mxu0
    %v807 = vadd.f32 0.0, %v806
    %808 = vmatmul.f32.gmra.mxu0 %v582
    %v809 = vpop.f32.mrf.mxu0
    %v810 = vadd.f32 0.0, %v809
    %811 = vdwg.mxu0
    %v812 = vadd.f32 %v684, %v765
    %v813 = vadd.f32 %v687, %v768
    %v814 = vadd.f32 %v690, %v771
    %v815 = vadd.f32 %v693, %v774
    %v816 = vadd.f32 %v696, %v777
    %v817 = vadd.f32 %v699, %v780
    %v818 = vadd.f32 %v702, %v783
    %v819 = vadd.f32 %v705, %v786
    %v820 = vadd.f32 %v708, %v789
    %v821 = vadd.f32 %v711, %v792
    %v822 = vadd.f32 %v714, %v795
    %v823 = vadd.f32 %v717, %v798
    %v824 = vadd.f32 %v720, %v801
    %v825 = vadd.f32 %v723, %v804
    %v826 = vadd.f32 %v726, %v807
    %v827 = vadd.f32 %v729, %v810
    %v828 = vld [vmem:[%s10] sm:$0x1]
    %v830 = vperm.slane %v828, 0
    %832 = vmatpush.msra.mxu0 %v827
    %833 = vmatpush.msra.mxu0 %v826
    %834 = vmatpush.msra.mxu0 %v825
    %835 = vmatpush.msra.mxu0 %v824
    %836 = vmatpush.msra.mxu0 %v823
    %837 = vmatpush.msra.mxu0 %v822
    %838 = vmatpush.msra.mxu0 %v821
    %839 = vmatpush.msra.mxu0 %v820
    %840 = vmatpush.msra.mxu0 %v819
    %841 = vmatpush.msra.mxu0 %v818
    %842 = vmatpush.msra.mxu0 %v817
    %843 = vmatpush.msra.mxu0 %v816
    %844 = vmatpush.msra.mxu0 %v815
    %845 = vmatpush.msra.mxu0 %v814
    %846 = vmatpush.msra.mxu0 %v813
    %847 = vmatpush.msra.mxu0 %v812
    %848 = vmatmul.f32.gmra.mxu0 %v117
    %v849 = vpop.f32.mrf.mxu0
    %v850 = vadd.f32 %v830, %v849
    %851 = vmatmul.f32.gmra.mxu0 %v118
    %v852 = vpop.f32.mrf.mxu0
    %v853 = vadd.f32 %v830, %v852
    %854 = vmatmul.f32.gmra.mxu0 %v119
    %v855 = vpop.f32.mrf.mxu0
    %v856 = vadd.f32 %v830, %v855
    %857 = vmatmul.f32.gmra.mxu0 %v120
    %v858 = vpop.f32.mrf.mxu0
    %v859 = vadd.f32 %v830, %v858
    %860 = vmatmul.f32.gmra.mxu0 %v121
    %v861 = vpop.f32.mrf.mxu0
    %v862 = vadd.f32 %v830, %v861
    %863 = vmatmul.f32.gmra.mxu0 %v122
    %v864 = vpop.f32.mrf.mxu0
    %v865 = vadd.f32 %v830, %v864
    %866 = vmatmul.f32.gmra.mxu0 %v123
    %v867 = vpop.f32.mrf.mxu0
    %v868 = vadd.f32 %v830, %v867
    %869 = vmatmul.f32.gmra.mxu0 %v124
    %v870 = vpop.f32.mrf.mxu0
    %v871 = vadd.f32 %v830, %v870
    %872 = vmatmul.f32.gmra.mxu0 %v125
    %v873 = vpop.f32.mrf.mxu0
    %v874 = vadd.f32 %v830, %v873
    %875 = vmatmul.f32.gmra.mxu0 %v126
    %v876 = vpop.f32.mrf.mxu0
    %v877 = vadd.f32 %v830, %v876
    %878 = vmatmul.f32.gmra.mxu0 %v127
    %v879 = vpop.f32.mrf.mxu0
    %v880 = vadd.f32 %v830, %v879
    %881 = vmatmul.f32.gmra.mxu0 %v128
    %v882 = vpop.f32.mrf.mxu0
    %v883 = vadd.f32 %v830, %v882
    %884 = vmatmul.f32.gmra.mxu0 %v129
    %v885 = vpop.f32.mrf.mxu0
    %v886 = vadd.f32 %v830, %v885
    %887 = vmatmul.f32.gmra.mxu0 %v130
    %v888 = vpop.f32.mrf.mxu0
    %v889 = vadd.f32 %v830, %v888
    %890 = vmatmul.f32.gmra.mxu0 %v131
    %v891 = vpop.f32.mrf.mxu0
    %v892 = vadd.f32 %v830, %v891
    %893 = vmatmul.f32.gmra.mxu0 %v132
    %v894 = vpop.f32.mrf.mxu0
    %v895 = vadd.f32 %v830, %v894
    %896 = vdwg.mxu0
    %897 = vmax.xlane.f32.xlu0 %v850
    %v898 = vpop.xlane.xlu0 %897
    %899 = vmax.xlane.f32.xlu0 %v853
    %v900 = vpop.xlane.xlu0 %899
    %901 = vmax.xlane.f32.xlu0 %v856
    %v902 = vpop.xlane.xlu0 %901
    %903 = vmax.xlane.f32.xlu0 %v859
    %v904 = vpop.xlane.xlu0 %903
    %905 = vmax.xlane.f32.xlu0 %v862
    %v906 = vpop.xlane.xlu0 %905
    %907 = vmax.xlane.f32.xlu0 %v865
    %v908 = vpop.xlane.xlu0 %907
    %909 = vmax.xlane.f32.xlu0 %v868
    %v910 = vpop.xlane.xlu0 %909
    %911 = vmax.xlane.f32.xlu0 %v871
    %v912 = vpop.xlane.xlu0 %911
    %913 = vmax.xlane.f32.xlu0 %v874
    %v914 = vpop.xlane.xlu0 %913
    %915 = vmax.xlane.f32.xlu0 %v877
    %v916 = vpop.xlane.xlu0 %915
    %917 = vmax.xlane.f32.xlu0 %v880
    %v918 = vpop.xlane.xlu0 %917
    %919 = vmax.xlane.f32.xlu0 %v883
    %v920 = vpop.xlane.xlu0 %919
    %921 = vmax.xlane.f32.xlu0 %v886
    %v922 = vpop.xlane.xlu0 %921
    %923 = vmax.xlane.f32.xlu0 %v889
    %v924 = vpop.xlane.xlu0 %923
    %925 = vmax.xlane.f32.xlu0 %v892
    %v926 = vpop.xlane.xlu0 %925
    %927 = vmax.xlane.f32.xlu0 %v895
    %v928 = vpop.xlane.xlu0 %927
    %v929 = vsub.f32 %v850, %v898
    %v930 = vsub.f32 %v853, %v900
    %v931 = vsub.f32 %v856, %v902
    %v932 = vsub.f32 %v859, %v904
    %v933 = vsub.f32 %v862, %v906
    %v934 = vsub.f32 %v865, %v908
    %v935 = vsub.f32 %v868, %v910
    %v936 = vsub.f32 %v871, %v912
    %v937 = vsub.f32 %v874, %v914
    %v938 = vsub.f32 %v877, %v916
    %v939 = vsub.f32 %v880, %v918
    %v940 = vsub.f32 %v883, %v920
    %v941 = vsub.f32 %v886, %v922
    %v942 = vsub.f32 %v889, %v924
    %v943 = vsub.f32 %v892, %v926
    %v944 = vsub.f32 %v895, %v928
    %v945 = vmul.f32 %v929, 1.442695
    %v946 = vpow.pop %v945
    %v947 = vmul.f32 %v930, 1.442695
    %v948 = vpow.pop %v947
    %v949 = vmul.f32 %v931, 1.442695
    %v950 = vpow.pop %v949
    %v951 = vmul.f32 %v932, 1.442695
    %v952 = vpow.pop %v951
    %v953 = vmul.f32 %v933, 1.442695
    %v954 = vpow.pop %v953
    %v955 = vmul.f32 %v934, 1.442695
    %v956 = vpow.pop %v955
    %v957 = vmul.f32 %v935, 1.442695
    %v958 = vpow.pop %v957
    %v959 = vmul.f32 %v936, 1.442695
    %v960 = vpow.pop %v959
    %v961 = vmul.f32 %v937, 1.442695
    %v962 = vpow.pop %v961
    %v963 = vmul.f32 %v938, 1.442695
    %v964 = vpow.pop %v963
    %v965 = vmul.f32 %v939, 1.442695
    %v966 = vpow.pop %v965
    %v967 = vmul.f32 %v940, 1.442695
    %v968 = vpow.pop %v967
    %v969 = vmul.f32 %v941, 1.442695
    %v970 = vpow.pop %v969
    %v971 = vmul.f32 %v942, 1.442695
    %v972 = vpow.pop %v971
    %v973 = vmul.f32 %v943, 1.442695
    %v974 = vpow.pop %v973
    %v975 = vmul.f32 %v944, 1.442695
    %v976 = vpow.pop %v975
    %977 = vadd.xlane.f32.xlu0 %v946
    %v978 = vpop.xlane.xlu0 %977
    %979 = vadd.xlane.f32.xlu0 %v948
    %v980 = vpop.xlane.xlu0 %979
    %981 = vadd.xlane.f32.xlu0 %v950
    %v982 = vpop.xlane.xlu0 %981
    %983 = vadd.xlane.f32.xlu0 %v952
    %v984 = vpop.xlane.xlu0 %983
    %985 = vadd.xlane.f32.xlu0 %v954
    %v986 = vpop.xlane.xlu0 %985
    %987 = vadd.xlane.f32.xlu0 %v956
    %v988 = vpop.xlane.xlu0 %987
    %989 = vadd.xlane.f32.xlu0 %v958
    %v990 = vpop.xlane.xlu0 %989
    %991 = vadd.xlane.f32.xlu0 %v960
    %v992 = vpop.xlane.xlu0 %991
    %993 = vadd.xlane.f32.xlu0 %v962
    %v994 = vpop.xlane.xlu0 %993
    %995 = vadd.xlane.f32.xlu0 %v964
    %v996 = vpop.xlane.xlu0 %995
    %997 = vadd.xlane.f32.xlu0 %v966
    %v998 = vpop.xlane.xlu0 %997
    %999 = vadd.xlane.f32.xlu0 %v968
    %v1000 = vpop.xlane.xlu0 %999
    %1001 = vadd.xlane.f32.xlu0 %v970
    %v1002 = vpop.xlane.xlu0 %1001
    %1003 = vadd.xlane.f32.xlu0 %v972
    %v1004 = vpop.xlane.xlu0 %1003
    %1005 = vadd.xlane.f32.xlu0 %v974
    %v1006 = vpop.xlane.xlu0 %1005
    %1007 = vadd.xlane.f32.xlu0 %v976
    %v1008 = vpop.xlane.xlu0 %1007
    %v1009 = vlog2.pop %v978
    %v1010 = vmul.f32 %v1009, 0.6931472
    %v1011 = vlog2.pop %v980
    %v1012 = vmul.f32 %v1011, 0.6931472
    %v1013 = vlog2.pop %v982
    %v1014 = vmul.f32 %v1013, 0.6931472
    %v1015 = vlog2.pop %v984
    %v1016 = vmul.f32 %v1015, 0.6931472
    %v1017 = vlog2.pop %v986
    %v1018 = vmul.f32 %v1017, 0.6931472
    %v1019 = vlog2.pop %v988
    %v1020 = vmul.f32 %v1019, 0.6931472
    %v1021 = vlog2.pop %v990
    %v1022 = vmul.f32 %v1021, 0.6931472
    %v1023 = vlog2.pop %v992
    %v1024 = vmul.f32 %v1023, 0.6931472
    %v1025 = vlog2.pop %v994
    %v1026 = vmul.f32 %v1025, 0.6931472
    %v1027 = vlog2.pop %v996
    %v1028 = vmul.f32 %v1027, 0.6931472
    %v1029 = vlog2.pop %v998
    %v1030 = vmul.f32 %v1029, 0.6931472
    %v1031 = vlog2.pop %v1000
    %v1032 = vmul.f32 %v1031, 0.6931472
    %v1033 = vlog2.pop %v1002
    %v1034 = vmul.f32 %v1033, 0.6931472
    %v1035 = vlog2.pop %v1004
    %v1036 = vmul.f32 %v1035, 0.6931472
    %v1037 = vlog2.pop %v1006
    %v1038 = vmul.f32 %v1037, 0.6931472
    %v1039 = vlog2.pop %v1008
    %v1040 = vmul.f32 %v1039, 0.6931472
    %v1041 = vsub.f32 %v929, %v1010
    %v1042 = vsub.f32 %v930, %v1012
    %v1043 = vsub.f32 %v931, %v1014
    %v1044 = vsub.f32 %v932, %v1016
    %v1045 = vsub.f32 %v933, %v1018
    %v1046 = vsub.f32 %v934, %v1020
    %v1047 = vsub.f32 %v935, %v1022
    %v1048 = vsub.f32 %v936, %v1024
    %v1049 = vsub.f32 %v937, %v1026
    %v1050 = vsub.f32 %v938, %v1028
    %v1051 = vsub.f32 %v939, %v1030
    %v1052 = vsub.f32 %v940, %v1032
    %v1053 = vsub.f32 %v941, %v1034
    %v1054 = vsub.f32 %v942, %v1036
    %v1055 = vsub.f32 %v943, %v1038
    %v1056 = vsub.f32 %v944, %v1040
    %1057 = vst [vmem:[#allocation11] sm:$0xff] %v1041
    %1058 = vst [vmem:[#allocation11 + $0x8] sm:$0xff] %v1042
    %1059 = vst [vmem:[#allocation11 + $0x10] sm:$0xff] %v1043
    %1060 = vst [vmem:[#allocation11 + $0x18] sm:$0xff] %v1044
    %1061 = vst [vmem:[#allocation11 + $0x20] sm:$0xff] %v1045
    %1062 = vst [vmem:[#allocation11 + $0x28] sm:$0xff] %v1046
    %1063 = vst [vmem:[#allocation11 + $0x30] sm:$0xff] %v1047
    %1064 = vst [vmem:[#allocation11 + $0x38] sm:$0xff] %v1048
    %1065 = vst [vmem:[#allocation11 + $0x40] sm:$0xff] %v1049
    %1066 = vst [vmem:[#allocation11 + $0x48] sm:$0xff] %v1050
    %1067 = vst [vmem:[#allocation11 + $0x50] sm:$0xff] %v1051
    %1068 = vst [vmem:[#allocation11 + $0x58] sm:$0xff] %v1052
    %1069 = vst [vmem:[#allocation11 + $0x60] sm:$0xff] %v1053
    %1070 = vst [vmem:[#allocation11 + $0x68] sm:$0xff] %v1054
    %1071 = vst [vmem:[#allocation11 + $0x70] sm:$0xff] %v1055
    %1072 = vst [vmem:[#allocation11 + $0x78] sm:$0xff] %v1056
    // Predicated region
    $region66: #{tpu_custom_call.1} parent=1 // pred_check
      _
    $region67: #{tpu_custom_call.1} parent=1 // pred_check_branch
      %1074 = sbr.rel (0) target = $region69
    $region68: #{tpu_custom_call.1} parent=1 // pred_region
      %1076 = vsyncadd [#allocation4], 0
      %s1077 = sshll.u32 [#allocation11], 4
      %s1078 = int_to_ptr.vmem [resolvable:$true] %s1077
      %s1079 = sshll.u32 %s11, 4
      %s1080 = int_to_ptr.hbm [resolvable:$true] %s1079
      %1085 = dma.vmem_to_hbm [thread:$0]  %s1078, 2048, %s1080, [#allocation4], 128, 128, 8
    $region69: #{tpu_custom_call.1} parent=1 // pred_fallthru
      _
    // Predicated region
    $region70: #{tpu_custom_call.1} parent=1 // pred_check
      _
    $region71: #{tpu_custom_call.1} parent=1 // pred_check_branch
      %1087 = sbr.rel (0) target = $region73
    $region72: #{tpu_custom_call.1} parent=1 // pred_region
      %1089 = dma.done [#allocation4], 2048
    $region73: #{tpu_custom_call.1} parent=1 // pred_fallthru
      _
    %1090 = vsyncpa [#allocation3], 1
    %1091 = vsyncpa [#allocation6], 1
    %1092 = vsyncpa [#allocation9], 1
    %1093 = vsyncpa [#allocation4], 1

</llo_original>
